<compile_context>
chip_gen: v7x
topology: tpu7x:2x2x1
jax: 0.10.0
libtpu: 0.0.40
codegen_flags: <defaults>
</compile_context>

<pallas_src>
import functools

import jax
import jax.numpy as jnp
from jax import lax
from jax.experimental import pallas as pl
from jax.experimental.pallas import tpu as pltpu


# ----------------------------------------------------------------------------
# small helpers
# ----------------------------------------------------------------------------
def _cdiv(a, b):
    return -(-a // b)


def _round_up(a, m):
    return _cdiv(a, m) * m


_SQRT2 = 1.4142135623730951
_SUBLANE = {4: 8, 2: 16, 1: 32}          # dtype itemsize -> sublane multiple
_MAX_BLOCK_BYTES = 2 << 20               # ~2 MiB per block (v5e/v6e/v7x safe)


def _hash_u32(x):
    """'lowbias32' integer hash — good avalanche, pure VPU bit ops."""
    x = x ^ (x >> 16)
    x = x * jnp.uint32(0x7FEB352D)
    x = x ^ (x >> 15)
    x = x * jnp.uint32(0x846CA68B)
    x = x ^ (x >> 16)
    return x


def _erfinv_f32(x):
    """Single-precision erfinv (Giles 2012): only log1p / sqrt / where / FMA."""
    w = -jnp.log1p(-x * x)
    # central branch (w < 5)
    w1 = w - 2.5
    p1 = jnp.float32(2.81022636e-08)
    for c in (3.43273939e-07, -3.5233877e-06, -4.39150654e-06, 0.00021858087,
              -0.00125372503, -0.00417768164, 0.246640727, 1.50140941):
        p1 = jnp.float32(c) + p1 * w1
    # tail branch (w >= 5)
    w2 = jnp.sqrt(w) - 3.0
    p2 = jnp.float32(-0.000200214257)
    for c in (0.000100950558, 0.00134934322, -0.00367342844, 0.00573950773,
              -0.0076224613, 0.00943887047, 1.00167406, 2.83297682):
        p2 = jnp.float32(c) + p2 * w2
    return jnp.where(w < 5.0, p1, p2) * x


# ----------------------------------------------------------------------------
# Pallas kernels (noise generated on-chip; fused with the add)
# ----------------------------------------------------------------------------
def _gn_kernel_hw(seed_ref, x_ref, o_ref, *, sigma):
    """TPU backend: hardware PRNG, per-block stream = (seed, program_id)."""
    pltpu.prng_seed(seed_ref[0], pl.program_id(0))
    noise = pltpu.stateful_normal(x_ref.shape, jnp.float32)
    y = x_ref[...].astype(jnp.float32) + jnp.float32(sigma) * noise
    o_ref[...] = y.astype(o_ref.dtype)


def _gn_kernel_jnp(seed_ref, x_ref, o_ref, *, sigma):
    """Portable path: counter-based PRNG + inverse-CDF normal (pure jnp ops)."""
    rows, lanes = x_ref.shape                       # static block shape
    pid = pl.program_id(0)
    row = lax.broadcasted_iota(jnp.int32, (rows, lanes), 0)
    col = lax.broadcasted_iota(jnp.int32, (rows, lanes), 1)
    gidx = ((pid * rows + row) * lanes + col).astype(jnp.uint32)
    seed = seed_ref[0].astype(jnp.uint32) * jnp.uint32(0x9E3779B1)
    bits = _hash_u32(gidx ^ seed)
    # 24-bit uniform in (-1, 1), endpoints excluded (keeps erfinv finite).
    u = ((bits >> 8).astype(jnp.float32) + 0.5) * jnp.float32(2.0 ** -23) - 1.0
    noise = jnp.float32(_SQRT2) * _erfinv_f32(u)
    y = x_ref[...].astype(jnp.float32) + jnp.float32(sigma) * noise
    o_ref[...] = y.astype(o_ref.dtype)


# ----------------------------------------------------------------------------
# Wrapper
# ----------------------------------------------------------------------------
def gaussian_noise(x, seed, *, sigma=1.0, training=True):
    """Pallas GaussianNoise: x + N(0, sigma^2) in training, identity in eval."""
    # NOTE: static Python branch — `training`/`sigma` must not be traced values.
    if not training or sigma == 0.0:
        return x

    orig_shape = x.shape
    n = x.size
    itemsize = jnp.dtype(x.dtype).itemsize
    sub = _SUBLANE.get(itemsize, 8)

    # --- lane-dense 2-D layout, copy-free whenever n % lanes == 0 -----------
    lanes = None
    for cand in (512, 256, 128):                     # prefer >=1 full sublane tile
        if n % cand == 0 and n // cand >= sub:
            lanes = cand
            break
    if lanes is None:
        for cand in (512, 256, 128):
            if n % cand == 0:
                lanes = cand
                break
    pad = 0
    if lanes is None:                                # rare ragged case only
        lanes = 128
        pad = _round_up(n, lanes) - n

    xf = x.reshape(-1)
    if pad:
        xf = jnp.pad(xf, (0, pad))                   # fallback only; common path is copy-free
    rows = xf.size // lanes
    xf = xf.reshape(rows, lanes)

    # --- row tiling: <=2 MiB blocks, >=2 blocks for megacore when non-trivial
    cap_rows = max(sub, (_MAX_BLOCK_BYTES // (lanes * itemsize)) // sub * sub)
    if rows <= sub:
        block_rows = rows                            # single block == full array dim
    else:
        block_rows = min(cap_rows, _round_up(rows, sub))
        if rows > 2 * sub and _cdiv(rows, block_rows) < 2:
            block_rows = max(sub, _round_up(_cdiv(rows, 2), sub))
    grid = (_cdiv(rows, block_rows),)                # ragged last block is masked by Pallas

    # --- pick noise source: HW PRNG on real TPU, portable jnp path otherwise
    use_hw_prng = jax.default_backend() == "tpu"
    kernel = functools.partial(_gn_kernel_hw if use_hw_prng else _gn_kernel_jnp,
                               sigma=float(sigma))

    seed_arr = jnp.reshape(jnp.asarray(seed, jnp.int32), (1,))

    out = pl.pallas_call(
        kernel,
        out_shape=jax.ShapeDtypeStruct((rows, lanes), x.dtype),
        grid_spec=pltpu.PrefetchScalarGridSpec(
            num_scalar_prefetch=1,
            grid=grid,
            in_specs=[pl.BlockSpec((block_rows, lanes),
                                   lambda i, seed_ref: (i, 0))],
            out_specs=pl.BlockSpec((block_rows, lanes),
                                   lambda i, seed_ref: (i, 0)),
        ),
        compiler_params=pltpu.CompilerParams(
            dimension_semantics=("parallel",)),
    )(seed_arr, xf)

    out = out.reshape(-1)
    if pad:
        out = out[:n]
    return out.reshape(orig_shape)


# ----------------------------------------------------------------------------
if __name__ == "__main__":
    key = jax.random.PRNGKey(0)
    x = jax.random.normal(key, (2, 4, 16, 16), jnp.float32)  # small NCHW input

    # Training mode: noise is added.
    fwd = jax.jit(functools.partial(gaussian_noise, sigma=1.0, training=True))
    y = jax.block_until_ready(fwd(x, 0))

    assert y.shape == x.shape, y.shape
    assert y.dtype == x.dtype, y.dtype
    assert bool(jnp.all(jnp.isfinite(y)))
    assert not bool(jnp.allclose(y, x)), "noise was not added in training mode"

    noise = (y - x).reshape(-1)
    mean = float(jnp.mean(noise))
    std = float(jnp.std(noise))
    assert abs(mean) < 0.2, f"noise mean off: {mean}"
    assert 0.7 < std < 1.3, f"noise std off: {std}"

    # Different seeds give different noise.
    y2 = jax.block_until_ready(fwd(x, 1))
    assert not bool(jnp.allclose(y2, y)), "seed does not change the noise"

    # Eval mode: identity.
    y_eval = gaussian_noise(x, 0, sigma=1.0, training=False)
    assert bool(jnp.array_equal(y_eval, x))

    print("KERNEL_OK")
</pallas_src>

<mosaic_0001>
module attributes {stable_mosaic.version = 11 : i64} {
  func.func @_gn_kernel_jnp(%arg0: i32, %arg1: memref<1xi32, #tpu.memory_space<smem>>, %arg2: memref<8x256xf32, #tpu.memory_space<vmem>>, %arg3: memref<8x256xf32, #tpu.memory_space<vmem>>) attributes {dimension_semantics = [#tpu.dimension_semantics<parallel>], iteration_bounds = array<i64: 1>, scalar_prefetch = 1 : i64, scratch_operands = 0 : i64, tpu.core_type = #tpu.core_type<tc>, window_params = [{transform_indices = @transform_0, window_bounds = array<i64: 8, 256>}, {transform_indices = @transform_1, window_bounds = array<i64: 8, 256>}]} {
    %0 = tpu.iota {dimensions = array<i32: 0>} : vector<8x256xi32>
    %1 = tpu.iota {dimensions = array<i32: 1>} : vector<8x256xi32>
    %c8_i32 = arith.constant 8 : i32
    %2 = arith.muli %arg0, %c8_i32 : i32
    %3 = vector.broadcast %2 : i32 to vector<8x256xi32>
    %4 = arith.addi %3, %0 : vector<8x256xi32>
    %c256_i32 = arith.constant 256 : i32
    %5 = vector.broadcast %c256_i32 : i32 to vector<8x256xi32>
    %6 = arith.muli %4, %5 : vector<8x256xi32>
    %7 = arith.addi %6, %1 : vector<8x256xi32>
    %c0 = arith.constant 0 : index
    %8 = memref.load %arg1[%c0] : memref<1xi32, #tpu.memory_space<smem>>
    %c-1640531535_i32 = arith.constant -1640531535 : i32
    %9 = arith.muli %8, %c-1640531535_i32 : i32
    %10 = vector.broadcast %9 : i32 to vector<8x256xi32>
    %11 = arith.xori %7, %10 : vector<8x256xi32>
    %c16_i32 = arith.constant 16 : i32
    %12 = vector.broadcast %c16_i32 : i32 to vector<8x256xi32>
    %13 = arith.shrui %11, %12 : vector<8x256xi32>
    %14 = arith.xori %11, %13 : vector<8x256xi32>
    %c2146121005_i32 = arith.constant 2146121005 : i32
    %15 = vector.broadcast %c2146121005_i32 : i32 to vector<8x256xi32>
    %16 = arith.muli %14, %15 : vector<8x256xi32>
    %c15_i32 = arith.constant 15 : i32
    %17 = vector.broadcast %c15_i32 : i32 to vector<8x256xi32>
    %18 = arith.shrui %16, %17 : vector<8x256xi32>
    %19 = arith.xori %16, %18 : vector<8x256xi32>
    %c-2073254261_i32 = arith.constant -2073254261 : i32
    %20 = vector.broadcast %c-2073254261_i32 : i32 to vector<8x256xi32>
    %21 = arith.muli %19, %20 : vector<8x256xi32>
    %c16_i32_0 = arith.constant 16 : i32
    %22 = vector.broadcast %c16_i32_0 : i32 to vector<8x256xi32>
    %23 = arith.shrui %21, %22 : vector<8x256xi32>
    %24 = arith.xori %21, %23 : vector<8x256xi32>
    %c8_i32_1 = arith.constant 8 : i32
    %25 = vector.broadcast %c8_i32_1 : i32 to vector<8x256xi32>
    %26 = arith.shrui %24, %25 : vector<8x256xi32>
    %27 = arith.uitofp %26 : vector<8x256xi32> to vector<8x256xf32>
    %cst = arith.constant 5.000000e-01 : f32
    %28 = vector.broadcast %cst : f32 to vector<8x256xf32>
    %29 = arith.addf %27, %28 : vector<8x256xf32>
    %cst_2 = arith.constant 1.1920929E-7 : f32
    %30 = vector.broadcast %cst_2 : f32 to vector<8x256xf32>
    %31 = arith.mulf %29, %30 : vector<8x256xf32>
    %cst_3 = arith.constant 1.000000e+00 : f32
    %32 = vector.broadcast %cst_3 : f32 to vector<8x256xf32>
    %33 = arith.subf %31, %32 : vector<8x256xf32>
    %cst_4 = arith.constant 0.000000e+00 : f32
    %34 = vector.broadcast %cst_4 : f32 to vector<8x256xf32>
    %35 = arith.subf %34, %33 : vector<8x256xf32>
    %36 = arith.mulf %35, %33 : vector<8x256xf32>
    %37 = math.log1p %36 : vector<8x256xf32>
    %cst_5 = arith.constant 0.000000e+00 : f32
    %38 = vector.broadcast %cst_5 : f32 to vector<8x256xf32>
    %39 = arith.subf %38, %37 : vector<8x256xf32>
    %cst_6 = arith.constant 2.500000e+00 : f32
    %40 = vector.broadcast %cst_6 : f32 to vector<8x256xf32>
    %41 = arith.subf %39, %40 : vector<8x256xf32>
    %cst_7 = arith.constant 2.81022636E-8 : f32
    %42 = vector.broadcast %cst_7 : f32 to vector<8x256xf32>
    %43 = arith.mulf %42, %41 : vector<8x256xf32>
    %cst_8 = arith.constant 3.43273939E-7 : f32
    %44 = vector.broadcast %cst_8 : f32 to vector<8x256xf32>
    %45 = arith.addf %44, %43 : vector<8x256xf32>
    %46 = arith.mulf %45, %41 : vector<8x256xf32>
    %cst_9 = arith.constant -3.5233877E-6 : f32
    %47 = vector.broadcast %cst_9 : f32 to vector<8x256xf32>
    %48 = arith.addf %47, %46 : vector<8x256xf32>
    %49 = arith.mulf %48, %41 : vector<8x256xf32>
    %cst_10 = arith.constant -4.39150654E-6 : f32
    %50 = vector.broadcast %cst_10 : f32 to vector<8x256xf32>
    %51 = arith.addf %50, %49 : vector<8x256xf32>
    %52 = arith.mulf %51, %41 : vector<8x256xf32>
    %cst_11 = arith.constant 2.1858087E-4 : f32
    %53 = vector.broadcast %cst_11 : f32 to vector<8x256xf32>
    %54 = arith.addf %53, %52 : vector<8x256xf32>
    %55 = arith.mulf %54, %41 : vector<8x256xf32>
    %cst_12 = arith.constant -0.00125372503 : f32
    %56 = vector.broadcast %cst_12 : f32 to vector<8x256xf32>
    %57 = arith.addf %56, %55 : vector<8x256xf32>
    %58 = arith.mulf %57, %41 : vector<8x256xf32>
    %cst_13 = arith.constant -0.00417768164 : f32
    %59 = vector.broadcast %cst_13 : f32 to vector<8x256xf32>
    %60 = arith.addf %59, %58 : vector<8x256xf32>
    %61 = arith.mulf %60, %41 : vector<8x256xf32>
    %cst_14 = arith.constant 0.246640727 : f32
    %62 = vector.broadcast %cst_14 : f32 to vector<8x256xf32>
    %63 = arith.addf %62, %61 : vector<8x256xf32>
    %64 = arith.mulf %63, %41 : vector<8x256xf32>
    %cst_15 = arith.constant 1.50140941 : f32
    %65 = vector.broadcast %cst_15 : f32 to vector<8x256xf32>
    %66 = arith.addf %65, %64 : vector<8x256xf32>
    %67 = math.sqrt %39 : vector<8x256xf32>
    %cst_16 = arith.constant 3.000000e+00 : f32
    %68 = vector.broadcast %cst_16 : f32 to vector<8x256xf32>
    %69 = arith.subf %67, %68 : vector<8x256xf32>
    %cst_17 = arith.constant -2.00214257E-4 : f32
    %70 = vector.broadcast %cst_17 : f32 to vector<8x256xf32>
    %71 = arith.mulf %70, %69 : vector<8x256xf32>
    %cst_18 = arith.constant 1.00950558E-4 : f32
    %72 = vector.broadcast %cst_18 : f32 to vector<8x256xf32>
    %73 = arith.addf %72, %71 : vector<8x256xf32>
    %74 = arith.mulf %73, %69 : vector<8x256xf32>
    %cst_19 = arith.constant 0.00134934322 : f32
    %75 = vector.broadcast %cst_19 : f32 to vector<8x256xf32>
    %76 = arith.addf %75, %74 : vector<8x256xf32>
    %77 = arith.mulf %76, %69 : vector<8x256xf32>
    %cst_20 = arith.constant -0.00367342844 : f32
    %78 = vector.broadcast %cst_20 : f32 to vector<8x256xf32>
    %79 = arith.addf %78, %77 : vector<8x256xf32>
    %80 = arith.mulf %79, %69 : vector<8x256xf32>
    %cst_21 = arith.constant 0.00573950773 : f32
    %81 = vector.broadcast %cst_21 : f32 to vector<8x256xf32>
    %82 = arith.addf %81, %80 : vector<8x256xf32>
    %83 = arith.mulf %82, %69 : vector<8x256xf32>
    %cst_22 = arith.constant -0.0076224613 : f32
    %84 = vector.broadcast %cst_22 : f32 to vector<8x256xf32>
    %85 = arith.addf %84, %83 : vector<8x256xf32>
    %86 = arith.mulf %85, %69 : vector<8x256xf32>
    %cst_23 = arith.constant 0.00943887047 : f32
    %87 = vector.broadcast %cst_23 : f32 to vector<8x256xf32>
    %88 = arith.addf %87, %86 : vector<8x256xf32>
    %89 = arith.mulf %88, %69 : vector<8x256xf32>
    %cst_24 = arith.constant 1.00167406 : f32
    %90 = vector.broadcast %cst_24 : f32 to vector<8x256xf32>
    %91 = arith.addf %90, %89 : vector<8x256xf32>
    %92 = arith.mulf %91, %69 : vector<8x256xf32>
    %cst_25 = arith.constant 2.83297682 : f32
    %93 = vector.broadcast %cst_25 : f32 to vector<8x256xf32>
    %94 = arith.addf %93, %92 : vector<8x256xf32>
    %cst_26 = arith.constant 5.000000e+00 : f32
    %95 = vector.broadcast %cst_26 : f32 to vector<8x256xf32>
    %96 = arith.cmpf olt, %39, %95 : vector<8x256xf32>
    %97 = arith.select %96, %66, %94 : vector<8x256xi1>, vector<8x256xf32>
    %98 = arith.mulf %97, %33 : vector<8x256xf32>
    %cst_27 = arith.constant 1.41421354 : f32
    %99 = vector.broadcast %cst_27 : f32 to vector<8x256xf32>
    %100 = arith.mulf %99, %98 : vector<8x256xf32>
    %c0_28 = arith.constant 0 : index
    %c0_29 = arith.constant 0 : index
    %101 = vector.load %arg2[%c0_28, %c0_29] : memref<8x256xf32, #tpu.memory_space<vmem>>, vector<8x256xf32>
    %cst_30 = arith.constant 1.000000e+00 : f32
    %102 = vector.broadcast %cst_30 : f32 to vector<8x256xf32>
    %103 = arith.mulf %102, %100 : vector<8x256xf32>
    %104 = arith.addf %101, %103 : vector<8x256xf32>
    %c0_31 = arith.constant 0 : index
    %c0_32 = arith.constant 0 : index
    %105 = vector.load %arg3[%c0_31, %c0_32] : memref<8x256xf32, #tpu.memory_space<vmem>>, vector<8x256xf32>
    tpu.vector_store %arg3[%c0_31, %c0_32], %104 {strides = array<i32>} : memref<8x256xf32, #tpu.memory_space<vmem>>, vector<8x256xf32>,
    return
  }
  func.func @transform_0(%arg0: i32, %arg1: memref<1xi32, #tpu.memory_space<smem>>) -> (i32, i32) {
    %c0_i32 = arith.constant 0 : i32
    %c0_i32_0 = arith.constant 0 : i32
    return %arg0, %c0_i32 : i32, i32
  }
  func.func @transform_1(%arg0: i32, %arg1: memref<1xi32, #tpu.memory_space<smem>>) -> (i32, i32) {
    %c0_i32 = arith.constant 0 : i32
    %c0_i32_0 = arith.constant 0 : i32
    return %arg0, %c0_i32 : i32, i32
  }
}

</mosaic_0001>

<llo_original>
// kernel: gaussian_noise.1
$region0: #{gaussian_noise.1}
  #allocation0 [shape = 'u32[]', space=smem, size = 0x4, offset = 0x4, fixed_abs, tag = 'smem constant byte address 0x4 - core index']
  #allocation1 [shape = 'u32[144,128]{1,0:T(1,128)}', space=vmem, size = 0x12000, scoped, tag = 'internal scratch']
  #allocation2 [shape = 's32[1]{0}', space=sflag, size = 0x4, scoped, tag = 'scoped memory for gaussian_noise.1']
  #allocation3 [shape = 's32[1]{0:T(128)S(6)}', space=smem, size = 0x200, scoped, tag = 'prefetched SMEM operand 0']
  %s0 = inlined_call_operand.<no memory space> [shape: s32[1], index: 0, kind: input, shape index: {}]
  %s1 = inlined_call_operand.vmem [shape: f32[8,256], index: 1, kind: input, shape index: {}]
  %s2 = inlined_call_operand.vmem [shape: f32[8,256], index: 2, kind: output, shape index: {}]
  %s3 = sld [smem:[#allocation0]]
  $region14: #{gaussian_noise.1} parent=0
    _
  %s5 = ssub.s32 1, %s3
  %s6 = scalar_select 0, %s5, %s3
  %7 = sst [smem:[#allocation3]] %s0
  // Predicated region
  $region2: #{gaussian_noise.1} parent=0 // pred_check
    _
  $region3: #{gaussian_noise.1} parent=0 // pred_check_branch
    %9 = sbr.rel (0) target = $region5
  $region4: #{gaussian_noise.1} parent=0 // pred_region
    _
  $region5: #{gaussian_noise.1} parent=0 // pred_fallthru
    _
  %v10 = vlaneseq
  %v11 = vshrl.u32 %v10, 7
  %v12 = vlaneseq
  %v13 = vand.u32 %v12, 127
  %v14 = vadd.s32 %v13, 128
  %s15 = smul.u32 0, 8
  %v16 = vstv %s15
  %v17 = vadd.s32 %v16, %v11
  %v18 = vmul.u32 %v17, 256
  %v19 = vadd.s32 %v18, %v13
  %v20 = vadd.s32 %v18, %v14
  %s21 = sld [smem:[#allocation3]]
  %s22 = smul.u32 %s21, 2654435761
  %v23 = vstv %s22
  %v24 = vxor.u32 %v19, %v23
  %v25 = vxor.u32 %v20, %v23
  %v26 = vshrl.u32 %v24, 16
  %v27 = vshrl.u32 %v25, 16
  %v28 = vxor.u32 %v24, %v26
  %v29 = vxor.u32 %v25, %v27
  %v30 = vmul.u32 %v28, 2146121005
  %v31 = vmul.u32 %v29, 2146121005
  %v32 = vshrl.u32 %v30, 15
  %v33 = vshrl.u32 %v31, 15
  %v34 = vxor.u32 %v30, %v32
  %v35 = vxor.u32 %v31, %v33
  %v36 = vmul.u32 %v34, 2221713035
  %v37 = vmul.u32 %v35, 2221713035
  %v38 = vshrl.u32 %v36, 16
  %v39 = vshrl.u32 %v37, 16
  %v40 = vxor.u32 %v36, %v38
  %v41 = vxor.u32 %v37, %v39
  %v42 = vshrl.u32 %v40, 8
  %v43 = vshrl.u32 %v41, 8
  %v44 = vshrl.u32 %v42, 16
  %v45 = vand.u32 %v42, 65535
  %v46 = vcvt.s32.f32 %v44
  %v47 = vmul.f32 %v46, 65536.0
  %v48 = vcvt.s32.f32 %v45
  %v49 = vadd.f32 %v47, %v48
  %v50 = vshrl.u32 %v43, 16
  %v51 = vand.u32 %v43, 65535
  %v52 = vcvt.s32.f32 %v50
  %v53 = vmul.f32 %v52, 65536.0
  %v54 = vcvt.s32.f32 %v51
  %v55 = vadd.f32 %v53, %v54
  %v56 = vadd.f32 %v49, 0.5
  %v57 = vadd.f32 %v55, 0.5
  %v58 = vmul.f32 %v56, 1.1920929e-07
  %v59 = vmul.f32 %v57, 1.1920929e-07
  %v60 = vsub.f32 %v58, 1.0
  %v61 = vsub.f32 %v59, 1.0
  %v62 = vsub.f32 0.0, %v60
  %v63 = vsub.f32 0.0, %v61
  %v64 = vmul.f32 %v62, %v60
  %v65 = vmul.f32 %v63, %v61
  %v66 = vadd.f32 %v64, 1.0
  %v67 = vlog2.pop %v66
  %v68 = vmul.f32 %v67, 0.6931472
  %v69 = vmul.f32 -0.5, %v64
  %v70 = vadd.f32 %v69, 1.0
  %v71 = vmul.f32 %v70, %v64
  %v72 = vand.u32 2147483647, %v64
  %vm73 = vcmp.lt.f32.partialorder %v72, 0.0004427343
  %v74 = vsel %vm73, %v71, %v68
  %v75 = vadd.f32 %v65, 1.0
  %v76 = vlog2.pop %v75
  %v77 = vmul.f32 %v76, 0.6931472
  %v78 = vmul.f32 -0.5, %v65
  %v79 = vadd.f32 %v78, 1.0
  %v80 = vmul.f32 %v79, %v65
  %v81 = vand.u32 2147483647, %v65
  %vm82 = vcmp.lt.f32.partialorder %v81, 0.0004427343
  %v83 = vsel %vm82, %v80, %v77
  %v84 = vsub.f32 0.0, %v74
  %v85 = vsub.f32 0.0, %v83
  %v86 = vsub.f32 %v84, 2.5
  %v87 = vsub.f32 %v85, 2.5
  %v88 = vmul.f32 %v86, 2.8102264e-08
  %v89 = vmul.f32 %v87, 2.8102264e-08
  %v90 = vadd.f32 %v88, 3.4327394e-07
  %v91 = vadd.f32 %v89, 3.4327394e-07
  %v92 = vmul.f32 %v90, %v86
  %v93 = vmul.f32 %v91, %v87
  %v94 = vadd.f32 %v92, -3.5233877e-06
  %v95 = vadd.f32 %v93, -3.5233877e-06
  %v96 = vmul.f32 %v94, %v86
  %v97 = vmul.f32 %v95, %v87
  %v98 = vadd.f32 %v96, -4.3915065e-06
  %v99 = vadd.f32 %v97, -4.3915065e-06
  %v100 = vmul.f32 %v98, %v86
  %v101 = vmul.f32 %v99, %v87
  %v102 = vadd.f32 %v100, 0.00021858087
  %v103 = vadd.f32 %v101, 0.00021858087
  %v104 = vmul.f32 %v102, %v86
  %v105 = vmul.f32 %v103, %v87
  %v106 = vadd.f32 %v104, -0.001253725
  %v107 = vadd.f32 %v105, -0.001253725
  %v108 = vmul.f32 %v106, %v86
  %v109 = vmul.f32 %v107, %v87
  %v110 = vadd.f32 %v108, -0.0041776816
  %v111 = vadd.f32 %v109, -0.0041776816
  %v112 = vmul.f32 %v110, %v86
  %v113 = vmul.f32 %v111, %v87
  %v114 = vadd.f32 %v112, 0.24664073
  %v115 = vadd.f32 %v113, 0.24664073
  %v116 = vmul.f32 %v114, %v86
  %v117 = vmul.f32 %v115, %v87
  %v118 = vadd.f32 %v116, 1.5014094
  %v119 = vadd.f32 %v117, 1.5014094
  %v120 = vrsqrt.pop %v84
  %v121 = vmul.f32 %v84, %v120
  %vm122 = vcmp.eq.f32.partialorder %v84, inf
  %v123 = vsel %vm122, %v84, %v121
  %vm124 = vcmp.eq.f32.partialorder %v84, 0.0
  %v125 = vand.u32 %v84, 2147483648
  %v126 = vsel %vm124, %v125, %v123
  %v127 = vrsqrt.pop %v85
  %v128 = vmul.f32 %v85, %v127
  %vm129 = vcmp.eq.f32.partialorder %v85, inf
  %v130 = vsel %vm129, %v85, %v128
  %vm131 = vcmp.eq.f32.partialorder %v85, 0.0
  %v132 = vand.u32 %v85, 2147483648
  %v133 = vsel %vm131, %v132, %v130
  %v134 = vsub.f32 %v126, 3.0
  %v135 = vsub.f32 %v133, 3.0
  %v136 = vmul.f32 %v134, -0.00020021426
  %v137 = vmul.f32 %v135, -0.00020021426
  %v138 = vadd.f32 %v136, 0.00010095056
  %v139 = vadd.f32 %v137, 0.00010095056
  %v140 = vmul.f32 %v138, %v134
  %v141 = vmul.f32 %v139, %v135
  %v142 = vadd.f32 %v140, 0.0013493432
  %v143 = vadd.f32 %v141, 0.0013493432
  %v144 = vmul.f32 %v142, %v134
  %v145 = vmul.f32 %v143, %v135
  %v146 = vadd.f32 %v144, -0.0036734284
  %v147 = vadd.f32 %v145, -0.0036734284
  %v148 = vmul.f32 %v146, %v134
  %v149 = vmul.f32 %v147, %v135
  %v150 = vadd.f32 %v148, 0.0057395077
  %v151 = vadd.f32 %v149, 0.0057395077
  %v152 = vmul.f32 %v150, %v134
  %v153 = vmul.f32 %v151, %v135
  %v154 = vadd.f32 %v152, -0.0076224613
  %v155 = vadd.f32 %v153, -0.0076224613
  %v156 = vmul.f32 %v154, %v134
  %v157 = vmul.f32 %v155, %v135
  %v158 = vadd.f32 %v156, 0.0094388705
  %v159 = vadd.f32 %v157, 0.0094388705
  %v160 = vmul.f32 %v158, %v134
  %v161 = vmul.f32 %v159, %v135
  %v162 = vadd.f32 %v160, 1.001674
  %v163 = vadd.f32 %v161, 1.001674
  %v164 = vmul.f32 %v162, %v134
  %v165 = vmul.f32 %v163, %v135
  %v166 = vadd.f32 %v164, 2.8329768
  %v167 = vadd.f32 %v165, 2.8329768
  %vm168 = vcmp.lt.f32.partialorder %v84, 5.0
  %vm169 = vcmp.lt.f32.partialorder %v85, 5.0
  %v170 = vsel %vm168, %v118, %v166
  %v171 = vsel %vm169, %v119, %v167
  %v172 = vmul.f32 %v170, %v60
  %v173 = vmul.f32 %v171, %v61
  %v174 = vmul.f32 %v172, 1.4142135
  %v175 = vmul.f32 %v173, 1.4142135
  %v176 = vld [vmem:[%s1] sm:$0xff]
  %v177 = vld [vmem:[%s1 + $0x8] sm:$0xff]
  %v178 = vadd.f32 %v176, %v174
  %v179 = vadd.f32 %v177, %v175
  %180 = vst [vmem:[%s2] sm:$0xff] %v178
  %181 = vst [vmem:[%s2 + $0x8] sm:$0xff] %v179
  // Predicated region
  $region6: #{gaussian_noise.1} parent=0 // pred_check
    _
  $region7: #{gaussian_noise.1} parent=0 // pred_check_branch
    %183 = sbr.rel (0) target = $region9
  $region8: #{gaussian_noise.1} parent=0 // pred_region
    _
  $region9: #{gaussian_noise.1} parent=0 // pred_fallthru
    _
  // Predicated region
  $region10: #{gaussian_noise.1} parent=0 // pred_check
    _
  $region11: #{gaussian_noise.1} parent=0 // pred_check_branch
    %185 = sbr.rel (0) target = $region13
  $region12: #{gaussian_noise.1} parent=0 // pred_region
    _
  $region13: #{gaussian_noise.1} parent=0 // pred_fallthru
    _

</llo_original>
